<compile_context>
chip_gen: v6e
topology: v6e:2x2x1
jax: 0.10.0
libtpu: 0.0.40
codegen_flags: <defaults>
</compile_context>

<pallas_src>
import jax
import jax.numpy as jnp
from jax.experimental import pallas as pl
from jax.experimental.pallas import tpu as pltpu


# --------------------------------------------------------------------------- #
# Kernel
# --------------------------------------------------------------------------- #
def _attention_kernel(enc_ref, v_ref, out_ref, m_ref, l_ref, acc_ref):
    """One (batch-tile, seq-tile) step of the collapsed attention.

    enc_ref: (bt, st, H) encoder tile      v_ref: (H, 1) collapsed projection
    out_ref: (bt, H) context, written on the last seq step
    m/l/acc: (bt,1)/(bt,1)/(bt,H) f32 online-softmax state (VMEM scratch)
    """
    si = pl.program_id(1)

    @pl.when(si == 0)
    def _init():
        m_ref[...] = jnp.full(m_ref.shape, -jnp.inf, m_ref.dtype)
        l_ref[...] = jnp.zeros(l_ref.shape, l_ref.dtype)
        acc_ref[...] = jnp.zeros(acc_ref.shape, acc_ref.dtype)

    enc = enc_ref[...]                                      # (bt, st, H)
    bt, st, h = enc.shape

    # Logits for this chunk: ONE fused MXU matvec over all bt*st rows (v is
    # shared across batches), then relayout only the tiny result so the
    # sequence axis sits on lanes for the softmax reductions.
    logits = jnp.dot(enc.reshape(bt * st, h), v_ref[...],
                     preferred_element_type=jnp.float32)    # (bt*st, 1)
    logits = logits.reshape(bt, st)                         # (bt, st) lane-dense

    m_prev = m_ref[...]                                     # (bt, 1)
    m_new = jnp.maximum(m_prev, jnp.max(logits, axis=-1, keepdims=True))
    alpha = jnp.exp(m_prev - m_new)                         # rescale of old state
    p = jnp.exp(logits - m_new)                             # (bt, st) unnormalized

    l_ref[...] = alpha * l_ref[...] + jnp.sum(p, axis=-1, keepdims=True)

    # Weighted sum of encoder rows: batched MXU contraction over the chunk.
    pv = jnp.einsum("bqs,bsh->bqh",
                    p.reshape(bt, 1, st).astype(enc.dtype), enc,
                    preferred_element_type=jnp.float32)     # (bt, 1, H)
    acc_ref[...] = alpha * acc_ref[...] + pv.reshape(bt, h)
    m_ref[...] = m_new

    @pl.when(si == pl.num_programs(1) - 1)
    def _finalize():
        # Normalize AFTER the PV matmul, in f32 (H elems/row instead of S),
        # divide on the EUP approx-reciprocal slot.
        inv_l = pl.reciprocal(l_ref[...], approx=True)      # (bt, 1)
        out_ref[...] = (acc_ref[...] * inv_l).astype(out_ref.dtype)


# --------------------------------------------------------------------------- #
# Host-side helpers
# --------------------------------------------------------------------------- #
def collapse_attention_params(params):
    """Collapse linear1(enc half) -> linear2 -> linear3 -> to_weight into a
    single (H, 1) projection.  Exact: there is no nonlinearity, and the
    hidden_state / bias contributions are constant over the sequence so they
    cancel in the softmax."""
    H = params["w2"].shape[0]
    w1e_t = params["w1"][:, :H].T                                  # (H, H)
    v = w1e_t @ params["w2"].T @ params["w3"].T @ params["wt"].T   # (H, 1)
    return v


def _tpu_hw_info():
    """(vmem_capacity_bytes, tensorcores_per_chip), with safe fallbacks."""
    vmem = 64 * 1024 * 1024           # conservative default (safe on v7x too)
    cores = 1
    try:
        info = pltpu.get_tpu_info()
        vmem = int(getattr(info, "vmem_capacity_bytes", vmem))
        for name in ("num_cores", "cores_per_chip", "tensorcores_per_chip"):
            if hasattr(info, name):
                cores = max(cores, int(getattr(info, name)))
    except Exception:
        pass
    try:
        d = jax.devices()[0]
        cores = max(cores, int(getattr(d, "num_cores", 1)))
        kind = str(getattr(d, "device_kind", "")).lower()
        if "v7" in kind or "7x" in kind:   # v7x: 2 TensorCores per chip
            cores = max(cores, 2)
    except Exception:
        pass
    return vmem, max(1, cores)


def _choose_tiles(B, S, H, itemsize, tile_budget, min_steps):
    """Pick (batch_tile, seq_tile) for the (bt, st, H) encoder blocks.

    Block-tiling constraints (last two dims multiple of (8,128) or full dim):
      * output block (bt, H): bt must be a multiple of 8 or equal (padded) B,
      * encoder block (bt, st, H): st must be a multiple of 8 or equal S.
    Targets: per-buffer encoder tile near the 2-8 MiB HBM-roofline knee,
    double-buffered tiles + scratch within the VMEM budget, and >= min_steps
    grid steps on the parallel batch axis (>= 2 per TensorCore) when B allows.
    """
    target_hi = 8 * 1024 * 1024
    min_bt = B if B <= 8 else 8

    def fits(bt, st):
        enc_bytes = 2 * bt * st * H * itemsize      # double-buffered input tile
        out_bytes = 2 * bt * H * itemsize           # double-buffered output tile
        scr_bytes = bt * (H + 2) * 4                # f32 acc / m / l scratch
        return enc_bytes + out_bytes + scr_bytes <= tile_budget

    # Sequence tile: full S unless even the minimal legal batch tile cannot
    # fit (long-sequence case, e.g. v7x's 64 MiB VMEM).  The kernel's online
    # softmax makes any multiple-of-8 divisor of S correct.
    st = S
    if not fits(min_bt, S):
        best = 0
        c = 8
        while c < S:
            if S % c == 0 and fits(min_bt, c):
                best = c
            c += 8
        if best:
            st = best
        # else: TODO(synk): S is not a multiple of 8 (or even one 8-row slice
        # is too large); keep full-S tiles and rely on vmem_limit_bytes.

    # Batch tile: as many rows as the budget / ~8 MiB-per-buffer knee allow.
    bt = min(B, max(1, target_hi // max(1, st * H * itemsize)))
    if B > min_steps:
        bt = min(bt, max(1, B // min_steps))        # keep >= min_steps steps
    if B <= 8:
        bt = B                                      # single step: bt == padded B
    else:
        bt = max(8, (bt // 8) * 8)                  # dense (multiple-of-8) out blocks
        while bt > 8 and not fits(bt, st):
            bt -= 8
    return bt, st


def attention_forward(hidden_state, encoder_outputs, v, *, seq_tile=None):
    """hidden_state: (B, H) (its contribution cancels inside the softmax),
    encoder_outputs: (B, S, H), v: (H, 1) collapsed projection.
    Returns the context vector (B, H)."""
    del hidden_state  # mathematically has no effect on the module's output
    B, S, H = encoder_outputs.shape
    dtype = encoder_outputs.dtype
    itemsize = int(jnp.dtype(dtype).itemsize)
    v = jnp.asarray(v).reshape(H, 1).astype(dtype)

    # Per-generation VMEM budget (v5e/v6e: 128 MiB physical -> ~96 MiB scoped,
    # v7x: 64 MiB physical -> ~40 MiB scoped); chooser and compiler agree.
    vmem_cap, cores = _tpu_hw_info()
    vmem_limit = max(16 * 1024 * 1024,
                     min(int(0.75 * vmem_cap), vmem_cap - 24 * 1024 * 1024))
    tile_budget = max(4 * 1024 * 1024, vmem_limit - 4 * 1024 * 1024)
    min_steps = max(2, 2 * cores)

    bt, st = _choose_tiles(B, S, H, itemsize, tile_budget, min_steps)
    if seq_tile is not None:
        assert S % seq_tile == 0 and (seq_tile % 8 == 0 or seq_tile == S)
        st = seq_tile

    # Pad B so it need not divide the batch tile (padded rows are zeros:
    # uniform softmax, zero context, sliced off below).
    Bp = pl.cdiv(B, bt) * bt
    enc = encoder_outputs
    if Bp != B:
        enc = jnp.pad(enc, ((0, Bp - B), (0, 0), (0, 0)))

    grid = (Bp // bt, S // st)

    out = pl.pallas_call(
        _attention_kernel,
        out_shape=jax.ShapeDtypeStruct((Bp, H), dtype),
        grid_spec=pltpu.PrefetchScalarGridSpec(
            num_scalar_prefetch=0,
            grid=grid,
            in_specs=[
                pl.BlockSpec((bt, st, H), lambda b, s: (b, s, 0)),  # encoder tile
                pl.BlockSpec((H, 1), lambda b, s: (0, 0)),          # collapsed proj
            ],
            out_specs=pl.BlockSpec((bt, H), lambda b, s: (b, 0)),   # dense context
            scratch_shapes=[
                pltpu.VMEM((bt, 1), jnp.float32),   # running max
                pltpu.VMEM((bt, 1), jnp.float32),   # running denom
                pltpu.VMEM((bt, H), jnp.float32),   # running context accumulator
            ],
        ),
        compiler_params=pltpu.CompilerParams(
            dimension_semantics=("parallel", "arbitrary"),
            vmem_limit_bytes=vmem_limit,
        ),
    )(enc, v)

    return out if Bp == B else out[:B]


# --------------------------------------------------------------------------- #
# Reference (plain JAX replica of the full PyTorch forward) and init
# --------------------------------------------------------------------------- #
def _reference_forward(hidden_state, encoder_outputs, params):
    B, S, H = encoder_outputs.shape
    hid = jnp.broadcast_to(hidden_state.reshape(B, 1, H), (B, S, H))
    cat = jnp.concatenate([encoder_outputs, hid], axis=2).reshape(-1, 2 * H)
    x = cat @ params["w1"].T + params["b1"]
    x = x @ params["w2"].T + params["b2"]
    x = x @ params["w3"].T + params["b3"]
    logits = (x @ params["wt"].T).reshape(B, S)
    attn = jax.nn.softmax(logits, axis=1)
    return jnp.einsum("bs,bsh->bh", attn, encoder_outputs)


def _init_params(key, hidden_size):
    """Deterministic init matching nn.Linear shapes (weight: (out, in))."""
    H = hidden_size
    ks = jax.random.split(key, 7)
    u = lambda k, shape, fan_in: jax.random.uniform(
        k, shape, jnp.float32, -1.0 / jnp.sqrt(fan_in), 1.0 / jnp.sqrt(fan_in))
    return {
        "w1": u(ks[0], (H, 2 * H), 2 * H), "b1": u(ks[1], (H,), 2 * H),
        "w2": u(ks[2], (H, H), H),         "b2": u(ks[3], (H,), H),
        "w3": u(ks[4], (H, H), H),         "b3": u(ks[5], (H,), H),
        "wt": u(ks[6], (1, H), H),         # to_weight, bias=False
    }


if __name__ == "__main__":
    B, S, H = 2, 8, 32
    key = jax.random.PRNGKey(0)
    k_hid, k_enc, k_par, k_enc2 = jax.random.split(key, 4)

    hidden_state = jax.random.normal(k_hid, (B, H), jnp.float32)
    encoder_outputs = jax.random.normal(k_enc, (B, S, H), jnp.float32)
    params = _init_params(k_par, H)

    # Collapse the (no-nonlinearity) linear chain once, outside the kernel.
    v = collapse_attention_params(params)

    # 1) Main path: full-S tiles, single seq step.
    ctx = attention_forward(hidden_state, encoder_outputs, v)
    ctx = jax.block_until_ready(ctx)
    ref = _reference_forward(hidden_state, encoder_outputs, params)
    assert ctx.shape == (B, H)
    assert jnp.allclose(ctx, ref, atol=1e-3, rtol=1e-3), "mismatch vs reference"

    # 2) Long-sequence path: force sequence tiling to exercise the online
    #    softmax accumulation across seq-grid steps at a small shape.
    S2 = 16
    encoder_outputs2 = jax.random.normal(k_enc2, (B, S2, H), jnp.float32)
    ctx2 = attention_forward(hidden_state, encoder_outputs2, v, seq_tile=8)
    ctx2 = jax.block_until_ready(ctx2)
    ref2 = _reference_forward(hidden_state, encoder_outputs2, params)
    assert ctx2.shape == (B, H)
    assert jnp.allclose(ctx2, ref2, atol=1e-3, rtol=1e-3), "mismatch (seq-tiled)"

    print("KERNEL_OK")
</pallas_src>

<mosaic_0001>
module attributes {stable_mosaic.version = 11 : i64} {
  func.func @_attention_kernel(%arg0: i32, %arg1: i32, %arg2: memref<2x8x32xf32, #tpu.memory_space<vmem>>, %arg3: memref<32x1xf32, #tpu.memory_space<vmem>>, %arg4: memref<2x32xf32, #tpu.memory_space<vmem>>, %arg5: memref<2x1xf32, #tpu.memory_space<vmem>>, %arg6: memref<2x1xf32, #tpu.memory_space<vmem>>, %arg7: memref<2x32xf32, #tpu.memory_space<vmem>>) attributes {dimension_semantics = [#tpu.dimension_semantics<parallel>, #tpu.dimension_semantics<arbitrary>], iteration_bounds = array<i64: 1, 1>, scalar_prefetch = 0 : i64, scratch_operands = 3 : i64, tpu.core_type = #tpu.core_type<tc>, window_params = [{transform_indices = @transform_0, window_bounds = array<i64: 2, 8, 32>}, {pipeline_mode = #tpu.pipeline_mode<synchronous>, transform_indices = @transform_1, window_bounds = array<i64: 32, 1>}, {transform_indices = @transform_2, window_bounds = array<i64: 2, 32>}]} {
    %c0_i32 = arith.constant 0 : i32
    %0 = arith.cmpi eq, %arg1, %c0_i32 : i32
    %1 = arith.extui %0 : i1 to i32
    %c0_i32_0 = arith.constant 0 : i32
    %2 = arith.cmpi ne, %1, %c0_i32_0 : i32
    scf.if %2 {
      %cst_22 = arith.constant 0xFF800000 : f32
      %35 = vector.broadcast %cst_22 : f32 to vector<2x1xf32>
      %c0_23 = arith.constant 0 : index
      %c0_24 = arith.constant 0 : index
      %36 = vector.load %arg5[%c0_23, %c0_24] : memref<2x1xf32, #tpu.memory_space<vmem>>, vector<2x1xf32>
      tpu.vector_store %arg5[%c0_23, %c0_24], %35 {strides = array<i32>} : memref<2x1xf32, #tpu.memory_space<vmem>>, vector<2x1xf32>,
      %cst_25 = arith.constant 0.000000e+00 : f32
      %37 = vector.broadcast %cst_25 : f32 to vector<2x1xf32>
      %c0_26 = arith.constant 0 : index
      %c0_27 = arith.constant 0 : index
      %38 = vector.load %arg6[%c0_26, %c0_27] : memref<2x1xf32, #tpu.memory_space<vmem>>, vector<2x1xf32>
      tpu.vector_store %arg6[%c0_26, %c0_27], %37 {strides = array<i32>} : memref<2x1xf32, #tpu.memory_space<vmem>>, vector<2x1xf32>,
      %cst_28 = arith.constant 0.000000e+00 : f32
      %39 = vector.broadcast %cst_28 : f32 to vector<2x32xf32>
      %c0_29 = arith.constant 0 : index
      %c0_30 = arith.constant 0 : index
      %40 = vector.load %arg7[%c0_29, %c0_30] : memref<2x32xf32, #tpu.memory_space<vmem>>, vector<2x32xf32>
      tpu.vector_store %arg7[%c0_29, %c0_30], %39 {strides = array<i32>} : memref<2x32xf32, #tpu.memory_space<vmem>>, vector<2x32xf32>,
    } else {
    }
    %c0 = arith.constant 0 : index
    %c0_1 = arith.constant 0 : index
    %c0_2 = arith.constant 0 : index
    %3 = vector.load %arg2[%c0, %c0_1, %c0_2] : memref<2x8x32xf32, #tpu.memory_space<vmem>>, vector<2x8x32xf32>
    %4 = vector.shape_cast %3 : vector<2x8x32xf32> to vector<16x32xf32>
    %c0_3 = arith.constant 0 : index
    %c0_4 = arith.constant 0 : index
    %5 = vector.load %arg3[%c0_3, %c0_4] : memref<32x1xf32, #tpu.memory_space<vmem>>, vector<32x1xf32>
    %cst = arith.constant dense<0.000000e+00> : vector<16x1xf32>
    %6 = tpu.matmul %4, %5, %cst {dimension_numbers = #tpu.dot_dimension_numbers<[1], [0], [0], [1], [0, 0, 1, 1], [], []>} : vector<16x32xf32>, vector<32x1xf32>, vector<16x1xf32> -> vector<16x1xf32>
    %7 = vector.shape_cast %6 : vector<16x1xf32> to vector<2x8xf32>
    %c0_5 = arith.constant 0 : index
    %c0_6 = arith.constant 0 : index
    %8 = vector.load %arg5[%c0_5, %c0_6] : memref<2x1xf32, #tpu.memory_space<vmem>>, vector<2x1xf32>
    %cst_7 = arith.constant dense<0xFF800000> : vector<2xf32>
    %9 = vector.multi_reduction <maximumf>, %7, %cst_7 [1] : vector<2x8xf32> to vector<2xf32>
    %10 = vector.shape_cast %9 : vector<2xf32> to vector<2x1xf32>
    %11 = arith.maximumf %8, %10 : vector<2x1xf32>
    %12 = arith.subf %8, %11 : vector<2x1xf32>
    %13 = math.exp %12 : vector<2x1xf32>
    %14 = vector.broadcast %11 : vector<2x1xf32> to vector<2x8xf32>
    %15 = arith.subf %7, %14 : vector<2x8xf32>
    %16 = math.exp %15 : vector<2x8xf32>
    %c0_8 = arith.constant 0 : index
    %c0_9 = arith.constant 0 : index
    %17 = vector.load %arg6[%c0_8, %c0_9] : memref<2x1xf32, #tpu.memory_space<vmem>>, vector<2x1xf32>
    %18 = arith.mulf %13, %17 : vector<2x1xf32>
    %cst_10 = arith.constant dense<0.000000e+00> : vector<2xf32>
    %19 = vector.multi_reduction <add>, %16, %cst_10 [1] : vector<2x8xf32> to vector<2xf32>
    %20 = vector.shape_cast %19 : vector<2xf32> to vector<2x1xf32>
    %21 = arith.addf %18, %20 : vector<2x1xf32>
    %c0_11 = arith.constant 0 : index
    %c0_12 = arith.constant 0 : index
    %22 = vector.load %arg6[%c0_11, %c0_12] : memref<2x1xf32, #tpu.memory_space<vmem>>, vector<2x1xf32>
    tpu.vector_store %arg6[%c0_11, %c0_12], %21 {strides = array<i32>} : memref<2x1xf32, #tpu.memory_space<vmem>>, vector<2x1xf32>,
    %23 = vector.shape_cast %16 : vector<2x8xf32> to vector<2x1x8xf32>
    "tpu.trace_start"() <{level = 10 : i32, message = "bqs,bsh->bqh"}> : () -> ()
    %cst_13 = arith.constant dense<0.000000e+00> : vector<2x1x32xf32>
    %24 = tpu.matmul %23, %3, %cst_13 {dimension_numbers = #tpu.dot_dimension_numbers<[2], [1], [1], [2], [0, 0, 0, 1, 1, 2], [0], [0]>} : vector<2x1x8xf32>, vector<2x8x32xf32>, vector<2x1x32xf32> -> vector<2x1x32xf32>
    "tpu.trace_stop"() : () -> ()
    %c0_14 = arith.constant 0 : index
    %c0_15 = arith.constant 0 : index
    %25 = vector.load %arg7[%c0_14, %c0_15] : memref<2x32xf32, #tpu.memory_space<vmem>>, vector<2x32xf32>
    %26 = vector.broadcast %13 : vector<2x1xf32> to vector<2x32xf32>
    %27 = arith.mulf %26, %25 : vector<2x32xf32>
    %28 = vector.shape_cast %24 : vector<2x1x32xf32> to vector<2x32xf32>
    %29 = arith.addf %27, %28 : vector<2x32xf32>
    %c0_16 = arith.constant 0 : index
    %c0_17 = arith.constant 0 : index
    %30 = vector.load %arg7[%c0_16, %c0_17] : memref<2x32xf32, #tpu.memory_space<vmem>>, vector<2x32xf32>
    tpu.vector_store %arg7[%c0_16, %c0_17], %29 {strides = array<i32>} : memref<2x32xf32, #tpu.memory_space<vmem>>, vector<2x32xf32>,
    %c0_18 = arith.constant 0 : index
    %c0_19 = arith.constant 0 : index
    %31 = vector.load %arg5[%c0_18, %c0_19] : memref<2x1xf32, #tpu.memory_space<vmem>>, vector<2x1xf32>
    tpu.vector_store %arg5[%c0_18, %c0_19], %11 {strides = array<i32>} : memref<2x1xf32, #tpu.memory_space<vmem>>, vector<2x1xf32>,
    %c0_i32_20 = arith.constant 0 : i32
    %32 = arith.cmpi eq, %arg1, %c0_i32_20 : i32
    %33 = arith.extui %32 : i1 to i32
    %c0_i32_21 = arith.constant 0 : i32
    %34 = arith.cmpi ne, %33, %c0_i32_21 : i32
    scf.if %34 {
      %c0_22 = arith.constant 0 : index
      %c0_23 = arith.constant 0 : index
      %35 = vector.load %arg6[%c0_22, %c0_23] : memref<2x1xf32, #tpu.memory_space<vmem>>, vector<2x1xf32>
      %36 = tpu.reciprocal %35 {approx = true} : vector<2x1xf32> -> vector<2x1xf32>
      %c0_24 = arith.constant 0 : index
      %c0_25 = arith.constant 0 : index
      %37 = vector.load %arg7[%c0_24, %c0_25] : memref<2x32xf32, #tpu.memory_space<vmem>>, vector<2x32xf32>
      %38 = vector.broadcast %36 : vector<2x1xf32> to vector<2x32xf32>
      %39 = arith.mulf %37, %38 : vector<2x32xf32>
      %c0_26 = arith.constant 0 : index
      %c0_27 = arith.constant 0 : index
      %40 = vector.load %arg4[%c0_26, %c0_27] : memref<2x32xf32, #tpu.memory_space<vmem>>, vector<2x32xf32>
      tpu.vector_store %arg4[%c0_26, %c0_27], %39 {strides = array<i32>} : memref<2x32xf32, #tpu.memory_space<vmem>>, vector<2x32xf32>,
    } else {
    }
    return
  }
  func.func @transform_0(%arg0: i32, %arg1: i32) -> (i32, i32, i32) {
    %c0_i32 = arith.constant 0 : i32
    %c0_i32_0 = arith.constant 0 : i32
    return %arg0, %arg1, %c0_i32 : i32, i32, i32
  }
  func.func @transform_1(%arg0: i32, %arg1: i32) -> (i32, i32) {
    %c0_i32 = arith.constant 0 : i32
    %c0_i32_0 = arith.constant 0 : i32
    %c0_i32_1 = arith.constant 0 : i32
    return %c0_i32, %c0_i32_0 : i32, i32
  }
  func.func @transform_2(%arg0: i32, %arg1: i32) -> (i32, i32) {
    %c0_i32 = arith.constant 0 : i32
    %c0_i32_0 = arith.constant 0 : i32
    return %arg0, %c0_i32 : i32, i32
  }
}

</mosaic_0001>

<llo_original>
// kernel: tpu_custom_call.1
$region0: #{tpu_custom_call.1}
  #allocation0 [shape = 'u32[]', space=smem, size = 0x4, offset = 0x4, fixed_abs, tag = 'smem constant byte address 0x4 - core index']
  #allocation1 [shape = 'u32[144,128]{1,0:T(1,128)}', space=vmem, size = 0x12000, scoped, tag = 'internal scratch']
  #allocation2 [shape = 'f32[2,1]{1,0:T(2,128)}', space=vmem, size = 0x400, scoped, tag = 'scratch operand']
  #allocation3 [shape = 'f32[2,1]{1,0:T(2,128)}', space=vmem, size = 0x400, scoped, tag = 'scratch operand']
  #allocation4 [shape = 'f32[2,32]{1,0:T(2,128)}', space=vmem, size = 0x400, scoped, tag = 'scratch operand']
  %s0 = inlined_call_operand.vmem [shape: f32[2,8,32], index: 0, kind: input, shape index: {}]
  %s1 = inlined_call_operand.vmem [shape: f32[32,1], index: 1, kind: input, shape index: {}]
  %s2 = inlined_call_operand.hbm [shape: f32[2,32], index: 2, kind: output, shape index: {}]
  %s3 = sld [smem:[#allocation0]]
  $region26: #{tpu_custom_call.1} parent=0
    _
  %s5 = ssub.s32 1, %s3
  %s6 = scalar_select 0, %s5, %s3
  $region1: #{tpu_custom_call.1} parent=0
    #allocation5 [shape = 'u8[1024]{0}', space=vmem, size = 0x400, scoped, tag = 'output window, operand 0, single buffered']
    #allocation6 [shape = 's32[1]{0}', space=sflag, size = 0x4, scoped, tag = 'scoped memory for tpu_custom_call.1']
    %7 = vsyncpa [#allocation6], 0
    // Predicated region
    $region2: #{tpu_custom_call.1} parent=1 // pred_check
      _
    $region3: #{tpu_custom_call.1} parent=1 // pred_check_branch
      %9 = sbr.rel (0) target = $region5
    $region4: #{tpu_custom_call.1} parent=1 // pred_region
      _
    $region5: #{tpu_custom_call.1} parent=1 // pred_fallthru
      _
    // Predicated region
    $region6: #{tpu_custom_call.1} parent=1 // pred_check
      _
    $region7: #{tpu_custom_call.1} parent=1 // pred_check_branch
      %11 = sbr.rel (0) target = $region9
    $region8: #{tpu_custom_call.1} parent=1 // pred_region
      _
    $region9: #{tpu_custom_call.1} parent=1 // pred_fallthru
      _
    %p12 = scmp.eq.s32.totalorder 0, 0
    // Predicated region
    $region10: #{tpu_custom_call.1} parent=1 // pred_check
      %p13 = pneg %p12
    $region11: #{tpu_custom_call.1} parent=1 // pred_check_branch
      %15 = sbr.rel (%p13) target = $region13
    $region12: #{tpu_custom_call.1} parent=1 // pred_region
      %vm16 = vcmask 1024
      %17 = vst.msk [vmem:[#allocation2] sm:$0x3] %vm16, -inf
      %18 = vst.msk [vmem:[#allocation3] sm:$0x3] %vm16, 0.0
      %vm19 = vcmask 254976
      %20 = vst.msk [vmem:[#allocation4] sm:$0x3] %vm19, 0.0
    $region13: #{tpu_custom_call.1} parent=1 // pred_fallthru
      _
    %v21 = vld [vmem:[%s0] sm:$0xff]
    %v22 = vld [vmem:[%s0 + $0x8] sm:$0xff]
    %v23 = vld [vmem:[%s1] sm:$0xff]
    %v24 = vld [vmem:[%s1 + $0x8] sm:$0xff]
    %v25 = vld [vmem:[%s1 + $0x10] sm:$0xff]
    %v26 = vld [vmem:[%s1 + $0x18] sm:$0xff]
    %vm27 = vcmask 261120
    %v29 = vsel %vm27, %v21, 0
    %v32 = vsel %vm27, %v22, 0
    %34 = vmatprep.subr.mxu0 0.0
    %35 = vmatpush1.msra.mxu0 0.0
    %36 = vmatprep.subr.mxu0 0.0
    %37 = vmatpush1.msra.mxu0 0.0
    %38 = vmatprep.subr.mxu0 0.0
    %39 = vmatpush1.msra.mxu0 0.0
    %40 = vmatprep.subr.mxu0 0.0
    %41 = vmatpush1.msra.mxu0 0.0
    %42 = vmatprep.subr.mxu0 0.0
    %43 = vmatpush1.msra.mxu0 0.0
    %44 = vmatprep.subr.mxu0 0.0
    %45 = vmatpush1.msra.mxu0 0.0
    %46 = vmatprep.subr.mxu0 0.0
    %47 = vmatpush1.msra.mxu0 0.0
    %48 = vmatprep.subr.mxu0 0.0
    %49 = vmatpush1.msra.mxu0 0.0
    %50 = vmatprep.subr.mxu0 0.0
    %51 = vmatpush1.msra.mxu0 0.0
    %52 = vmatprep.subr.mxu0 0.0
    %53 = vmatpush1.msra.mxu0 0.0
    %54 = vmatprep.subr.mxu0 0.0
    %55 = vmatpush1.msra.mxu0 0.0
    %56 = vmatprep.subr.mxu0 0.0
    %57 = vmatpush1.msra.mxu0 0.0
    %58 = vmatprep.subr.mxu0 0.0
    %59 = vmatpush1.msra.mxu0 %v26
    %60 = vmatprep.subr.mxu0 0.0
    %61 = vmatpush1.msra.mxu0 %v25
    %62 = vmatprep.subr.mxu0 0.0
    %63 = vmatpush1.msra.mxu0 %v24
    %64 = vmatprep.subr.mxu0 0.0
    %65 = vmatpush1.msra.mxu0 %v23
    %66 = vmatprep.subr.mxu0 0.0
    %67 = vmatpush2.msra.mxu0 0.0
    %68 = vmatprep.subr.mxu0 0.0
    %69 = vmatpush2.msra.mxu0 0.0
    %70 = vmatprep.subr.mxu0 0.0
    %71 = vmatpush2.msra.mxu0 0.0
    %72 = vmatprep.subr.mxu0 0.0
    %73 = vmatpush2.msra.mxu0 0.0
    %74 = vmatprep.subr.mxu0 0.0
    %75 = vmatpush2.msra.mxu0 0.0
    %76 = vmatprep.subr.mxu0 0.0
    %77 = vmatpush2.msra.mxu0 0.0
    %78 = vmatprep.subr.mxu0 0.0
    %79 = vmatpush2.msra.mxu0 0.0
    %80 = vmatprep.subr.mxu0 0.0
    %81 = vmatpush2.msra.mxu0 0.0
    %82 = vmatprep.subr.mxu0 0.0
    %83 = vmatpush2.msra.mxu0 0.0
    %84 = vmatprep.subr.mxu0 0.0
    %85 = vmatpush2.msra.mxu0 0.0
    %86 = vmatprep.subr.mxu0 0.0
    %87 = vmatpush2.msra.mxu0 0.0
    %88 = vmatprep.subr.mxu0 0.0
    %89 = vmatpush2.msra.mxu0 0.0
    %90 = vmatprep.subr.mxu0 0.0
    %91 = vmatpush2.msra.mxu0 0.0
    %92 = vmatprep.subr.mxu0 0.0
    %93 = vmatpush2.msra.mxu0 0.0
    %94 = vmatprep.subr.mxu0 0.0
    %95 = vmatpush2.msra.mxu0 0.0
    %96 = vmatprep.subr.mxu0 0.0
    %97 = vmatpush2.msra.mxu0 0.0
    %98 = vmatprep.mubr.f32.mxu0 0.0
    %99 = vmatmul.mubr.f32.gmra.mxu0 %v29
    %v100 = vpop.f32.mrf.mxu0
    %v101 = vadd.f32 0.0, %v100
    %v102 = vpop.f32.mrf.mxu0
    %103 = vmatprep.mubr.f32.mxu0 0.0
    %104 = vmatmul.mubr.f32.gmra.mxu0 %v32
    %v105 = vpop.f32.mrf.mxu0
    %v106 = vadd.f32 0.0, %v105
    %v107 = vpop.f32.mrf.mxu0
    %108 = vdwg.mxu0
    %v109 = vld [vmem:[#allocation2] sm:$0x3]
    %112 = vset.pattern.permute.xlu0 0
    %113 = vperm.xlu0 %112, %v101
    %v114 = vpop.permute.xlu0 %113
    %115 = vset.pattern.permute.xlu0 0
    %116 = vperm.xlu0 %115, %v106
    %v117 = vpop.permute.xlu0 %116
    %v118 = vlaneseq
    %v119 = vand.u32 %v118, 127
    %v120 = vlaneseq
    %v121 = vshrl.u32 %v120, 7
    %v122 = vsub.s32 %v119, %v121
    %v123 = vrot.slane %v114, %v122
    %v124 = vlaneseq
    %v125 = vshrl.u32 %v124, 7
    %v126 = vsub.s32 %v119, %v125
    %v127 = vrot.slane %v117, %v126
    %vm128 = vcmask 1041409
    %v129 = vsel %vm128, %v127, %v123
    %vm131 = vcmask 58368
    %v132 = vsel %vm131, %v129, -inf
    %133 = vmax.xlane.f32.xlu0 %v132
    %v134 = vpop.xlane.xlu0 %133
    %v135 = vmax.f32 %v109, %v134
    %v136 = vsub.f32 %v109, %v135
    %v137 = vmul.f32 %v136, 1.442695
    %v138 = vpow.pop %v137
    %140 = vset.pattern.permute.xlu0 0
    %141 = vperm.xlu0 %140, %v135
    %v142 = vpop.permute.xlu0 %141
    %v143 = vlaneseq
    %v144 = vshrl.u32 %v143, 7
    %v145 = vsub.s32 0, %v144
    %v146 = vrot.slane %v142, %v145
    %v147 = vlaneseq
    %v148 = vshrl.u32 %v147, 7
    %v149 = vsub.s32 1, %v148
    %v150 = vrot.slane %v142, %v149
    %v153 = vsub.f32 %v101, %v146
    %v154 = vsub.f32 %v106, %v150
    %v155 = vmul.f32 %v153, 1.442695
    %v156 = vpow.pop %v155
    %v157 = vmul.f32 %v154, 1.442695
    %v158 = vpow.pop %v157
    %v159 = vld [vmem:[#allocation3] sm:$0x3]
    %v160 = vmul.f32 %v138, %v159
    %163 = vset.pattern.permute.xlu0 0
    %164 = vperm.xlu0 %163, %v156
    %v165 = vpop.permute.xlu0 %164
    %166 = vset.pattern.permute.xlu0 0
    %167 = vperm.xlu0 %166, %v158
    %v168 = vpop.permute.xlu0 %167
    %v169 = vlaneseq
    %v170 = vshrl.u32 %v169, 7
    %v171 = vsub.s32 %v119, %v170
    %v172 = vrot.slane %v165, %v171
    %v173 = vlaneseq
    %v174 = vshrl.u32 %v173, 7
    %v175 = vsub.s32 %v119, %v174
    %v176 = vrot.slane %v168, %v175
    %v177 = vsel %vm128, %v176, %v172
    %v179 = vsel %vm131, %v177, 0.0
    %180 = vadd.xlane.f32.xlu0 %v179
    %v181 = vpop.xlane.xlu0 %180
    %v182 = vadd.f32 %v160, %v181
    %vm183 = vcmask 1024
    %184 = vst.msk [vmem:[#allocation3] sm:$0x3] %vm183, %v182
    %vm185 = vcmask 64512
    %v186 = vsel %vm185, %v172, 0
    %188 = vmatprep.subr.mxu0 0.0
    %189 = vmatpush1.msra.mxu0 0.0
    %190 = vmatprep.subr.mxu0 0.0
    %191 = vmatpush1.msra.mxu0 0.0
    %192 = vmatprep.subr.mxu0 0.0
    %193 = vmatpush1.msra.mxu0 0.0
    %194 = vmatprep.subr.mxu0 0.0
    %195 = vmatpush1.msra.mxu0 0.0
    %196 = vmatprep.subr.mxu0 0.0
    %197 = vmatpush1.msra.mxu0 0.0
    %198 = vmatprep.subr.mxu0 0.0
    %199 = vmatpush1.msra.mxu0 0.0
    %200 = vmatprep.subr.mxu0 0.0
    %201 = vmatpush1.msra.mxu0 0.0
    %202 = vmatprep.subr.mxu0 0.0
    %203 = vmatpush1.msra.mxu0 0.0
    %204 = vmatprep.subr.mxu0 0.0
    %205 = vmatpush1.msra.mxu0 0.0
    %206 = vmatprep.subr.mxu0 0.0
    %207 = vmatpush1.msra.mxu0 0.0
    %208 = vmatprep.subr.mxu0 0.0
    %209 = vmatpush1.msra.mxu0 0.0
    %210 = vmatprep.subr.mxu0 0.0
    %211 = vmatpush1.msra.mxu0 0.0
    %212 = vmatprep.subr.mxu0 0.0
    %213 = vmatpush1.msra.mxu0 0.0
    %214 = vmatprep.subr.mxu0 0.0
    %215 = vmatpush1.msra.mxu0 0.0
    %216 = vmatprep.subr.mxu0 0.0
    %217 = vmatpush1.msra.mxu0 0.0
    %218 = vmatprep.subr.mxu0 0.0
    %219 = vmatpush1.msra.mxu0 %v21
    %220 = vmatprep.subr.mxu0 0.0
    %221 = vmatpush2.msra.mxu0 0.0
    %222 = vmatprep.subr.mxu0 0.0
    %223 = vmatpush2.msra.mxu0 0.0
    %224 = vmatprep.subr.mxu0 0.0
    %225 = vmatpush2.msra.mxu0 0.0
    %226 = vmatprep.subr.mxu0 0.0
    %227 = vmatpush2.msra.mxu0 0.0
    %228 = vmatprep.subr.mxu0 0.0
    %229 = vmatpush2.msra.mxu0 0.0
    %230 = vmatprep.subr.mxu0 0.0
    %231 = vmatpush2.msra.mxu0 0.0
    %232 = vmatprep.subr.mxu0 0.0
    %233 = vmatpush2.msra.mxu0 0.0
    %234 = vmatprep.subr.mxu0 0.0
    %235 = vmatpush2.msra.mxu0 0.0
    %236 = vmatprep.subr.mxu0 0.0
    %237 = vmatpush2.msra.mxu0 0.0
    %238 = vmatprep.subr.mxu0 0.0
    %239 = vmatpush2.msra.mxu0 0.0
    %240 = vmatprep.subr.mxu0 0.0
    %241 = vmatpush2.msra.mxu0 0.0
    %242 = vmatprep.subr.mxu0 0.0
    %243 = vmatpush2.msra.mxu0 0.0
    %244 = vmatprep.subr.mxu0 0.0
    %245 = vmatpush2.msra.mxu0 0.0
    %246 = vmatprep.subr.mxu0 0.0
    %247 = vmatpush2.msra.mxu0 0.0
    %248 = vmatprep.subr.mxu0 0.0
    %249 = vmatpush2.msra.mxu0 0.0
    %250 = vmatprep.subr.mxu0 0.0
    %251 = vmatpush2.msra.mxu0 0.0
    %252 = vmatprep.mubr.f32.mxu0 0.0
    %253 = vmatmul.mubr.f32.gmra.mxu0 %v186
    %v254 = vpop.f32.mrf.mxu0
    %v255 = vadd.f32 0.0, %v254
    %v256 = vpop.f32.mrf.mxu0
    %257 = vdwg.mxu0
    %v258 = vsel %vm185, %v176, 0
    %260 = vmatprep.subr.mxu0 0.0
    %261 = vmatpush1.msra.mxu0 0.0
    %262 = vmatprep.subr.mxu0 0.0
    %263 = vmatpush1.msra.mxu0 0.0
    %264 = vmatprep.subr.mxu0 0.0
    %265 = vmatpush1.msra.mxu0 0.0
    %266 = vmatprep.subr.mxu0 0.0
    %267 = vmatpush1.msra.mxu0 0.0
    %268 = vmatprep.subr.mxu0 0.0
    %269 = vmatpush1.msra.mxu0 0.0
    %270 = vmatprep.subr.mxu0 0.0
    %271 = vmatpush1.msra.mxu0 0.0
    %272 = vmatprep.subr.mxu0 0.0
    %273 = vmatpush1.msra.mxu0 0.0
    %274 = vmatprep.subr.mxu0 0.0
    %275 = vmatpush1.msra.mxu0 0.0
    %276 = vmatprep.subr.mxu0 0.0
    %277 = vmatpush1.msra.mxu0 0.0
    %278 = vmatprep.subr.mxu0 0.0
    %279 = vmatpush1.msra.mxu0 0.0
    %280 = vmatprep.subr.mxu0 0.0
    %281 = vmatpush1.msra.mxu0 0.0
    %282 = vmatprep.subr.mxu0 0.0
    %283 = vmatpush1.msra.mxu0 0.0
    %284 = vmatprep.subr.mxu0 0.0
    %285 = vmatpush1.msra.mxu0 0.0
    %286 = vmatprep.subr.mxu0 0.0
    %287 = vmatpush1.msra.mxu0 0.0
    %288 = vmatprep.subr.mxu0 0.0
    %289 = vmatpush1.msra.mxu0 0.0
    %290 = vmatprep.subr.mxu0 0.0
    %291 = vmatpush1.msra.mxu0 %v22
    %292 = vmatprep.subr.mxu0 0.0
    %293 = vmatpush2.msra.mxu0 0.0
    %294 = vmatprep.subr.mxu0 0.0
    %295 = vmatpush2.msra.mxu0 0.0
    %296 = vmatprep.subr.mxu0 0.0
    %297 = vmatpush2.msra.mxu0 0.0
    %298 = vmatprep.subr.mxu0 0.0
    %299 = vmatpush2.msra.mxu0 0.0
    %300 = vmatprep.subr.mxu0 0.0
    %301 = vmatpush2.msra.mxu0 0.0
    %302 = vmatprep.subr.mxu0 0.0
    %303 = vmatpush2.msra.mxu0 0.0
    %304 = vmatprep.subr.mxu0 0.0
    %305 = vmatpush2.msra.mxu0 0.0
    %306 = vmatprep.subr.mxu0 0.0
    %307 = vmatpush2.msra.mxu0 0.0
    %308 = vmatprep.subr.mxu0 0.0
    %309 = vmatpush2.msra.mxu0 0.0
    %310 = vmatprep.subr.mxu0 0.0
    %311 = vmatpush2.msra.mxu0 0.0
    %312 = vmatprep.subr.mxu0 0.0
    %313 = vmatpush2.msra.mxu0 0.0
    %314 = vmatprep.subr.mxu0 0.0
    %315 = vmatpush2.msra.mxu0 0.0
    %316 = vmatprep.subr.mxu0 0.0
    %317 = vmatpush2.msra.mxu0 0.0
    %318 = vmatprep.subr.mxu0 0.0
    %319 = vmatpush2.msra.mxu0 0.0
    %320 = vmatprep.subr.mxu0 0.0
    %321 = vmatpush2.msra.mxu0 0.0
    %322 = vmatprep.subr.mxu0 0.0
    %323 = vmatpush2.msra.mxu0 0.0
    %324 = vmatprep.mubr.f32.mxu0 0.0
    %325 = vmatmul.mubr.f32.gmra.mxu0 %v258
    %v326 = vpop.f32.mrf.mxu0
    %v327 = vadd.f32 0.0, %v326
    %v328 = vpop.f32.mrf.mxu0
    %329 = vdwg.mxu0
    %v330 = vld [vmem:[#allocation4] sm:$0x3]
    %332 = vset.pattern.permute.xlu0 0
    %333 = vperm.xlu0 %332, %v138
    %v334 = vpop.permute.xlu0 %333
    %v336 = vmul.f32 %v334, %v330
    %v339 = vrot.slane %v327, 7
    %v340 = vsel %vm128, %v339, %v255
    %v342 = vadd.f32 %v336, %v340
    %vm343 = vcmask 254976
    %344 = vst.msk [vmem:[#allocation4] sm:$0x3] %vm343, %v342
    %345 = vst.msk [vmem:[#allocation2] sm:$0x3] %vm183, %v135
    // Predicated region
    $region14: #{tpu_custom_call.1} parent=1 // pred_check
      %p346 = pneg %p12
    $region15: #{tpu_custom_call.1} parent=1 // pred_check_branch
      %348 = sbr.rel (%p346) target = $region17
    $region16: #{tpu_custom_call.1} parent=1 // pred_region
      %v349 = vld [vmem:[#allocation3] sm:$0x3]
      %v350 = vrcp.pop %v349
      %v351 = vld [vmem:[#allocation4] sm:$0x3]
      %353 = vset.pattern.permute.xlu0 0
      %354 = vperm.xlu0 %353, %v350
      %v355 = vpop.permute.xlu0 %354
      %v357 = vmul.f32 %v351, %v355
      %358 = vst.msk [vmem:[#allocation5] sm:$0x3] %vm343, %v357
    $region17: #{tpu_custom_call.1} parent=1 // pred_fallthru
      _
    // Predicated region
    $region18: #{tpu_custom_call.1} parent=1 // pred_check
      _
    $region19: #{tpu_custom_call.1} parent=1 // pred_check_branch
      %360 = sbr.rel (0) target = $region21
    $region20: #{tpu_custom_call.1} parent=1 // pred_region
      %s362 = ssub.s32 32, 32
      %363 = vsyncadd [#allocation6], %s362
      %s365 = sshll.u32 [#allocation5], 4
      %s366 = int_to_ptr.vmem [resolvable:$true] %s365
      %368 = dma.vmem_to_hbm [thread:$0]  %s366, 32, %s2, [#allocation6]
    $region21: #{tpu_custom_call.1} parent=1 // pred_fallthru
      _
    // Predicated region
    $region22: #{tpu_custom_call.1} parent=1 // pred_check
      _
    $region23: #{tpu_custom_call.1} parent=1 // pred_check_branch
      %370 = sbr.rel (0) target = $region25
    $region24: #{tpu_custom_call.1} parent=1 // pred_region
      %371 = dma.done [#allocation6], 32
    $region25: #{tpu_custom_call.1} parent=1 // pred_fallthru
      _
    %372 = vsyncpa [#allocation6], 1

</llo_original>
